<compile_context>
chip_gen: v5e
topology: v5e:2x2
jax: 0.10.0
libtpu: 0.0.40
codegen_flags: <defaults>
</compile_context>

<pallas_src>
import functools

import numpy as np
import jax
import jax.numpy as jnp
from jax.experimental import pallas as pl
from jax.experimental.pallas import tpu as pltpu


# ---------------------------------------------------------------------------
# Fused kernel: one image per grid step.
# ---------------------------------------------------------------------------
def _fused_kernel(x_ref, amat_ref, ab_ref, scale_ref, shift_ref, wband_ref,
                  o_ref, ypad_ref, *, H, W, Cin, Cout, K, S, pad, Ho, Wo):
    WC = W * Cin

    # ---- DimAttention: per-pixel 1x1 conv (block-diag matmul) -> sigmoid -> gate ----
    x = x_ref[0]                                                  # (H, W*Cin) f32
    logit = jnp.dot(x, amat_ref[...], preferred_element_type=jnp.float32)
    logit = logit + ab_ref[0, 0]                                  # SMEM scalar bias
    y = jax.nn.sigmoid(logit) * x                                 # weights * x (f32 VPU/EUP)

    # ---- BatchNorm2d (eval), folded per-channel scale/shift tiled over W ----
    y = y * scale_ref[...] + shift_ref[...]

    # ---- Zero-pad along H into VMEM scratch (W padding is folded into wband) ----
    if pad > 0:
        zrows = jnp.zeros((pad, WC), jnp.float32)
        ypad_ref[0:pad, :] = zrows
        ypad_ref[pad + H:pad + H + pad, :] = zrows
    ypad_ref[pad:pad + H, :] = y

    # ---- KxK conv as K row-shifted banded matmuls (bf16 MXU operands, f32 acc) ----
    acc = jnp.zeros((Ho, Wo * Cout), jnp.float32)
    for kh in range(K):
        if S == 1:
            rows = ypad_ref[kh:kh + Ho, :]                        # (Ho, W*Cin)
        else:
            rows = ypad_ref[pl.ds(kh, Ho, stride=S), :]           # strided rows for stride>1
        acc = acc + jnp.dot(rows.astype(jnp.bfloat16), wband_ref[kh],
                            preferred_element_type=jnp.float32)

    # ---- ReLU + lane-dense store (Ho, Wo*Cout) ----
    o_ref[0] = jnp.maximum(acc, 0.0).astype(o_ref.dtype)


# ---------------------------------------------------------------------------
# Wrapper: layout + parameter folding (runs once per call, all tiny constants)
# ---------------------------------------------------------------------------
def freq_attention_block(x_nchw, params, kernel_size, stride, padding):
    N, Cin, H, W = map(int, x_nchw.shape)
    K, S, pad = int(kernel_size), int(stride), int(padding)
    Cout = int(params["conv_w"].shape[0])
    Ho = (H + 2 * pad - K) // S + 1
    Wo = (W + 2 * pad - K) // S + 1
    WC = W * Cin

    # NCHW -> (N, H, W*Cin): channels fastest within a pixel, lane axis = W*Cin.
    x2 = jnp.transpose(x_nchw, (0, 2, 3, 1)).reshape(N, H, WC).astype(jnp.float32)

    # DimAttention 1x1 conv as a block-diagonal (W*Cin, W*Cin) matmul:
    # amat[w*Cin + c, w'*Cin + c'] = attn_w[c] if w == w' else 0
    wa = params["attn_w"].reshape(Cin).astype(jnp.float32)
    amat = jnp.kron(jnp.eye(W, dtype=jnp.float32),
                    wa[:, None] * jnp.ones((1, Cin), jnp.float32))        # (WC, WC)
    ab = params["attn_b"].reshape(1, 1).astype(jnp.float32)               # SMEM scalar

    # BatchNorm2d (eval) folded into per-channel scale/shift, tiled over W (lane axis).
    eps = 1e-5
    bn_scale = params["bn_gamma"] / jnp.sqrt(params["bn_var"] + eps)
    bn_shift = params["bn_beta"] - params["bn_mean"] * bn_scale
    scale_t = jnp.tile(bn_scale.astype(jnp.float32), W).reshape(1, WC)
    shift_t = jnp.tile(bn_shift.astype(jnp.float32), W).reshape(1, WC)

    # KxK conv -> K banded weight matrices (W*Cin, Wo*Cout):
    # wband[kh][w*Cin + c, j*Cout + o] = conv_w[o, c, kh, kw]  iff  w == j*S + kw - pad
    # (rows whose source pixel falls in the W-padding region are simply absent -> zero).
    sel = np.zeros((K, W, Wo), np.float32)
    for kw in range(K):
        for j in range(Wo):
            w_in = j * S + kw - pad
            if 0 <= w_in < W:
                sel[kw, w_in, j] = 1.0
    w_t = jnp.transpose(params["conv_w"], (2, 3, 1, 0)).astype(jnp.float32)  # (Kh,Kw,Cin,Cout)
    wband = jnp.einsum("xwj,hxco->hwcjo", jnp.asarray(sel), w_t)
    wband = wband.reshape(K, WC, Wo * Cout).astype(jnp.bfloat16)

    kernel = functools.partial(_fused_kernel, H=H, W=W, Cin=Cin, Cout=Cout,
                               K=K, S=S, pad=pad, Ho=Ho, Wo=Wo)

    out3 = pl.pallas_call(
        kernel,
        out_shape=jax.ShapeDtypeStruct((N, Ho, Wo * Cout), jnp.float32),
        grid_spec=pltpu.PrefetchScalarGridSpec(
            num_scalar_prefetch=0,
            grid=(N,),                                                  # >= 2 steps: both v7x TCs
            in_specs=[
                pl.BlockSpec((1, H, WC), lambda n: (n, 0, 0)),          # input image tile
                pl.BlockSpec((WC, WC), lambda n: (0, 0)),               # attn block-diag weight
                pl.BlockSpec(memory_space=pltpu.MemorySpace.SMEM),      # attn bias scalar
                pl.BlockSpec((1, WC), lambda n: (0, 0)),                # BN scale (tiled)
                pl.BlockSpec((1, WC), lambda n: (0, 0)),                # BN shift (tiled)
                pl.BlockSpec((K, WC, Wo * Cout), lambda n: (0, 0, 0)),  # banded conv weight (bf16)
            ],
            out_specs=pl.BlockSpec((1, Ho, Wo * Cout), lambda n: (n, 0, 0)),
            scratch_shapes=[pltpu.VMEM((H + 2 * pad, WC), jnp.float32)],  # H-padded activations
        ),
        compiler_params=pltpu.CompilerParams(
            dimension_semantics=("parallel",),
            vmem_limit_bytes=32 * 1024 * 1024,   # headroom if H/W grow; usage here is tiny
        ),
    )(x2, amat, ab, scale_t, shift_t, wband)

    out = out3.reshape(N, Ho, Wo, Cout)
    return jnp.transpose(out, (0, 3, 1, 2))      # back to NCHW to match the torch module


# ---------------------------------------------------------------------------
# Pure-JAX reference (mirrors the torch forward, eval-mode BN) for validation.
# ---------------------------------------------------------------------------
def reference_forward(x_nchw, params, kernel_size, stride, padding):
    eps = 1e-5
    wa = params["attn_w"].reshape(1, -1, 1, 1)
    logit = jnp.sum(x_nchw * wa, axis=1, keepdims=True) + params["attn_b"].reshape(1, 1, 1, 1)
    y = jax.nn.sigmoid(logit) * x_nchw
    scale = (params["bn_gamma"] / jnp.sqrt(params["bn_var"] + eps)).reshape(1, -1, 1, 1)
    shift = (params["bn_beta"] - params["bn_mean"]
             * params["bn_gamma"] / jnp.sqrt(params["bn_var"] + eps)).reshape(1, -1, 1, 1)
    y = y * scale + shift
    out = jax.lax.conv_general_dilated(
        y, params["conv_w"], window_strides=(stride, stride),
        padding=[(padding, padding), (padding, padding)],
        dimension_numbers=("NCHW", "OIHW", "NCHW"))
    return jnp.maximum(out, 0.0)


def make_params(key, cin, cout, k):
    ks = jax.random.split(key, 6)
    return {
        "attn_w": 0.2 * jax.random.normal(ks[0], (cin, 1), jnp.float32),
        "attn_b": 0.1 * jax.random.normal(ks[1], (1,), jnp.float32),
        "bn_gamma": 1.0 + 0.1 * jax.random.normal(ks[2], (cin,), jnp.float32),
        "bn_beta": 0.1 * jax.random.normal(ks[3], (cin,), jnp.float32),
        "bn_mean": 0.05 * jax.random.normal(ks[4], (cin,), jnp.float32),
        "bn_var": 1.0 + 0.1 * jnp.abs(jax.random.normal(ks[5], (cin,), jnp.float32)),
        "conv_w": 0.1 * jax.random.normal(jax.random.fold_in(key, 7),
                                          (cout, cin, k, k), jnp.float32),
    }


if __name__ == "__main__":
    key = jax.random.PRNGKey(0)

    N, Cin, H, W = 2, 4, 16, 16
    Cout, K, S, P = 8, 3, 1, 1

    kx, kp = jax.random.split(key)
    x = jax.random.normal(kx, (N, Cin, H, W), jnp.float32)   # NCHW like torch
    params = make_params(kp, Cin, Cout, K)

    fwd = jax.jit(functools.partial(freq_attention_block,
                                    kernel_size=K, stride=S, padding=P))
    out = jax.block_until_ready(fwd(x, params))

    assert out.shape == (N, Cout, H, W), out.shape
    assert bool(jnp.all(jnp.isfinite(out)))
    assert bool(jnp.all(out >= 0.0))  # ReLU output

    ref = reference_forward(x, params, K, S, P)
    assert bool(jnp.allclose(out, ref, rtol=3e-2, atol=3e-2)), \
        float(jnp.max(jnp.abs(out - ref)))

    print("KERNEL_OK")
</pallas_src>

<mosaic_0001>
module attributes {stable_mosaic.version = 11 : i64} {
  func.func @_fused_kernel(%arg0: i32, %arg1: memref<1x16x64xf32, #tpu.memory_space<vmem>>, %arg2: memref<64x64xf32, #tpu.memory_space<vmem>>, %arg3: memref<1x1xf32, #tpu.memory_space<smem>>, %arg4: memref<1x64xf32, #tpu.memory_space<vmem>>, %arg5: memref<1x64xf32, #tpu.memory_space<vmem>>, %arg6: memref<3x64x128xbf16, #tpu.memory_space<vmem>>, %arg7: memref<1x16x128xf32, #tpu.memory_space<vmem>>, %arg8: memref<18x64xf32, #tpu.memory_space<vmem>>) attributes {dimension_semantics = [#tpu.dimension_semantics<parallel>], iteration_bounds = array<i64: 2>, scalar_prefetch = 0 : i64, scratch_operands = 1 : i64, tpu.core_type = #tpu.core_type<tc>, window_params = [{transform_indices = @transform_0, window_bounds = array<i64: 1, 16, 64>}, {pipeline_mode = #tpu.pipeline_mode<synchronous>, transform_indices = @transform_1, window_bounds = array<i64: 64, 64>}, {transform_indices = @transform_2, window_bounds = array<i64: 1, 1>}, {pipeline_mode = #tpu.pipeline_mode<synchronous>, transform_indices = @transform_3, window_bounds = array<i64: 1, 64>}, {pipeline_mode = #tpu.pipeline_mode<synchronous>, transform_indices = @transform_4, window_bounds = array<i64: 1, 64>}, {pipeline_mode = #tpu.pipeline_mode<synchronous>, transform_indices = @transform_5, window_bounds = array<i64: 3, 64, 128>}, {transform_indices = @transform_6, window_bounds = array<i64: 1, 16, 128>}]} {
    %c0 = arith.constant 0 : index
    %c0_0 = arith.constant 0 : index
    %c0_1 = arith.constant 0 : index
    %0 = vector.load %arg1[%c0, %c0_0, %c0_1] : memref<1x16x64xf32, #tpu.memory_space<vmem>>, vector<1x16x64xf32>
    %1 = vector.shape_cast %0 : vector<1x16x64xf32> to vector<16x64xf32>
    %c0_2 = arith.constant 0 : index
    %c0_3 = arith.constant 0 : index
    %2 = vector.load %arg2[%c0_2, %c0_3] : memref<64x64xf32, #tpu.memory_space<vmem>>, vector<64x64xf32>
    %cst = arith.constant dense<0.000000e+00> : vector<16x64xf32>
    %3 = tpu.matmul %1, %2, %cst {dimension_numbers = #tpu.dot_dimension_numbers<[1], [0], [0], [1], [0, 0, 1, 1], [], []>} : vector<16x64xf32>, vector<64x64xf32>, vector<16x64xf32> -> vector<16x64xf32>
    %c0_4 = arith.constant 0 : index
    %c0_5 = arith.constant 0 : index
    %4 = memref.load %arg3[%c0_4, %c0_5] : memref<1x1xf32, #tpu.memory_space<smem>>
    %5 = vector.broadcast %4 : f32 to vector<16x64xf32>
    %6 = arith.addf %3, %5 : vector<16x64xf32>
    %7 = arith.negf %6 : vector<16x64xf32>
    %8 = math.exp %7 : vector<16x64xf32>
    %cst_6 = arith.constant 1.000000e+00 : f32
    %9 = vector.broadcast %cst_6 : f32 to vector<16x64xf32>
    %10 = arith.addf %9, %8 : vector<16x64xf32>
    %11 = arith.divf %9, %10 : vector<16x64xf32>
    %12 = arith.mulf %11, %1 : vector<16x64xf32>
    %c0_7 = arith.constant 0 : index
    %c0_8 = arith.constant 0 : index
    %13 = vector.load %arg4[%c0_7, %c0_8] : memref<1x64xf32, #tpu.memory_space<vmem>>, vector<1x64xf32>
    %14 = vector.broadcast %13 : vector<1x64xf32> to vector<16x64xf32>
    %15 = arith.mulf %12, %14 : vector<16x64xf32>
    %c0_9 = arith.constant 0 : index
    %c0_10 = arith.constant 0 : index
    %16 = vector.load %arg5[%c0_9, %c0_10] : memref<1x64xf32, #tpu.memory_space<vmem>>, vector<1x64xf32>
    %17 = vector.broadcast %16 : vector<1x64xf32> to vector<16x64xf32>
    %18 = arith.addf %15, %17 : vector<16x64xf32>
    %cst_11 = arith.constant 0.000000e+00 : f32
    %19 = vector.broadcast %cst_11 : f32 to vector<1x64xf32>
    %c0_12 = arith.constant 0 : index
    %c0_13 = arith.constant 0 : index
    %20 = vector.load %arg8[%c0_12, %c0_13] : memref<18x64xf32, #tpu.memory_space<vmem>>, vector<1x64xf32>
    tpu.vector_store %arg8[%c0_12, %c0_13], %19 {strides = array<i32>} : memref<18x64xf32, #tpu.memory_space<vmem>>, vector<1x64xf32>,
    %c17 = arith.constant 17 : index
    %c0_14 = arith.constant 0 : index
    %21 = vector.load %arg8[%c17, %c0_14] : memref<18x64xf32, #tpu.memory_space<vmem>>, vector<1x64xf32>
    tpu.vector_store %arg8[%c17, %c0_14], %19 {strides = array<i32>} : memref<18x64xf32, #tpu.memory_space<vmem>>, vector<1x64xf32>,
    %c1 = arith.constant 1 : index
    %c0_15 = arith.constant 0 : index
    %22 = vector.load %arg8[%c1, %c0_15] : memref<18x64xf32, #tpu.memory_space<vmem>>, vector<16x64xf32>
    tpu.vector_store %arg8[%c1, %c0_15], %18 {strides = array<i32>} : memref<18x64xf32, #tpu.memory_space<vmem>>, vector<16x64xf32>,
    %cst_16 = arith.constant 0.000000e+00 : f32
    %23 = vector.broadcast %cst_16 : f32 to vector<16x128xf32>
    %c0_17 = arith.constant 0 : index
    %c0_18 = arith.constant 0 : index
    %24 = vector.load %arg8[%c0_17, %c0_18] : memref<18x64xf32, #tpu.memory_space<vmem>>, vector<16x64xf32>
    %25 = arith.truncf %24 : vector<16x64xf32> to vector<16x64xbf16>
    %c0_19 = arith.constant 0 : index
    %c0_20 = arith.constant 0 : index
    %c0_21 = arith.constant 0 : index
    %26 = vector.load %arg6[%c0_19, %c0_20, %c0_21] : memref<3x64x128xbf16, #tpu.memory_space<vmem>>, vector<1x64x128xbf16>
    %27 = vector.shape_cast %26 : vector<1x64x128xbf16> to vector<64x128xbf16>
    %cst_22 = arith.constant dense<0.000000e+00> : vector<16x128xf32>
    %28 = tpu.matmul %25, %27, %cst_22 {dimension_numbers = #tpu.dot_dimension_numbers<[1], [0], [0], [1], [0, 0, 1, 1], [], []>} : vector<16x64xbf16>, vector<64x128xbf16>, vector<16x128xf32> -> vector<16x128xf32>
    %29 = arith.addf %23, %28 : vector<16x128xf32>
    %c1_23 = arith.constant 1 : index
    %c0_24 = arith.constant 0 : index
    %30 = vector.load %arg8[%c1_23, %c0_24] : memref<18x64xf32, #tpu.memory_space<vmem>>, vector<16x64xf32>
    %31 = arith.truncf %30 : vector<16x64xf32> to vector<16x64xbf16>
    %c1_25 = arith.constant 1 : index
    %c0_26 = arith.constant 0 : index
    %c0_27 = arith.constant 0 : index
    %32 = vector.load %arg6[%c1_25, %c0_26, %c0_27] : memref<3x64x128xbf16, #tpu.memory_space<vmem>>, vector<1x64x128xbf16>
    %33 = vector.shape_cast %32 : vector<1x64x128xbf16> to vector<64x128xbf16>
    %cst_28 = arith.constant dense<0.000000e+00> : vector<16x128xf32>
    %34 = tpu.matmul %31, %33, %cst_28 {dimension_numbers = #tpu.dot_dimension_numbers<[1], [0], [0], [1], [0, 0, 1, 1], [], []>} : vector<16x64xbf16>, vector<64x128xbf16>, vector<16x128xf32> -> vector<16x128xf32>
    %35 = arith.addf %29, %34 : vector<16x128xf32>
    %c2 = arith.constant 2 : index
    %c0_29 = arith.constant 0 : index
    %36 = vector.load %arg8[%c2, %c0_29] : memref<18x64xf32, #tpu.memory_space<vmem>>, vector<16x64xf32>
    %37 = arith.truncf %36 : vector<16x64xf32> to vector<16x64xbf16>
    %c2_30 = arith.constant 2 : index
    %c0_31 = arith.constant 0 : index
    %c0_32 = arith.constant 0 : index
    %38 = vector.load %arg6[%c2_30, %c0_31, %c0_32] : memref<3x64x128xbf16, #tpu.memory_space<vmem>>, vector<1x64x128xbf16>
    %39 = vector.shape_cast %38 : vector<1x64x128xbf16> to vector<64x128xbf16>
    %cst_33 = arith.constant dense<0.000000e+00> : vector<16x128xf32>
    %40 = tpu.matmul %37, %39, %cst_33 {dimension_numbers = #tpu.dot_dimension_numbers<[1], [0], [0], [1], [0, 0, 1, 1], [], []>} : vector<16x64xbf16>, vector<64x128xbf16>, vector<16x128xf32> -> vector<16x128xf32>
    %41 = arith.addf %35, %40 : vector<16x128xf32>
    %cst_34 = arith.constant 0.000000e+00 : f32
    %42 = vector.broadcast %cst_34 : f32 to vector<16x128xf32>
    %43 = arith.maximumf %41, %42 : vector<16x128xf32>
    %c0_35 = arith.constant 0 : index
    %c0_36 = arith.constant 0 : index
    %c0_37 = arith.constant 0 : index
    %44 = vector.load %arg7[%c0_35, %c0_36, %c0_37] : memref<1x16x128xf32, #tpu.memory_space<vmem>>, vector<1x16x128xf32>
    %45 = vector.shape_cast %44 : vector<1x16x128xf32> to vector<16x128xf32>
    %46 = vector.shape_cast %43 : vector<16x128xf32> to vector<1x16x128xf32>
    tpu.vector_store %arg7[%c0_35, %c0_36, %c0_37], %46 {strides = array<i32>} : memref<1x16x128xf32, #tpu.memory_space<vmem>>, vector<1x16x128xf32>,
    return
  }
  func.func @transform_0(%arg0: i32) -> (i32, i32, i32) {
    %c0_i32 = arith.constant 0 : i32
    %c0_i32_0 = arith.constant 0 : i32
    %c0_i32_1 = arith.constant 0 : i32
    return %arg0, %c0_i32, %c0_i32_0 : i32, i32, i32
  }
  func.func @transform_1(%arg0: i32) -> (i32, i32) {
    %c0_i32 = arith.constant 0 : i32
    %c0_i32_0 = arith.constant 0 : i32
    %c0_i32_1 = arith.constant 0 : i32
    return %c0_i32, %c0_i32_0 : i32, i32
  }
  func.func @transform_2(%arg0: i32) -> (i32, i32) {
    %c0_i32 = arith.constant 0 : i32
    %c0_i32_0 = arith.constant 0 : i32
    %c0_i32_1 = arith.constant 0 : i32
    return %c0_i32, %c0_i32_0 : i32, i32
  }
  func.func @transform_3(%arg0: i32) -> (i32, i32) {
    %c0_i32 = arith.constant 0 : i32
    %c0_i32_0 = arith.constant 0 : i32
    %c0_i32_1 = arith.constant 0 : i32
    return %c0_i32, %c0_i32_0 : i32, i32
  }
  func.func @transform_4(%arg0: i32) -> (i32, i32) {
    %c0_i32 = arith.constant 0 : i32
    %c0_i32_0 = arith.constant 0 : i32
    %c0_i32_1 = arith.constant 0 : i32
    return %c0_i32, %c0_i32_0 : i32, i32
  }
  func.func @transform_5(%arg0: i32) -> (i32, i32, i32) {
    %c0_i32 = arith.constant 0 : i32
    %c0_i32_0 = arith.constant 0 : i32
    %c0_i32_1 = arith.constant 0 : i32
    %c0_i32_2 = arith.constant 0 : i32
    return %c0_i32, %c0_i32_0, %c0_i32_1 : i32, i32, i32
  }
  func.func @transform_6(%arg0: i32) -> (i32, i32, i32) {
    %c0_i32 = arith.constant 0 : i32
    %c0_i32_0 = arith.constant 0 : i32
    %c0_i32_1 = arith.constant 0 : i32
    return %arg0, %c0_i32, %c0_i32_0 : i32, i32, i32
  }
}

</mosaic_0001>

<llo_original>
// kernel: tile.13
$region0: #{tile.13}
  #allocation0 [shape = 's32[1]{0}', space=sflag, size = 0x4, scoped, tag = 'scoped memory for tile.13']
  %s0 = inlined_call_operand.vmem [shape: f32[4], index: 0, kind: input, shape index: {}]
  %s1 = inlined_call_operand.vmem [shape: f32[16,4], index: 1, kind: output, shape index: {}]
  // Predicated region
  $region2: #{tile.13} parent=0 // pred_check
    _
  $region3: #{tile.13} parent=0 // pred_check_branch
    %3 = sbr.rel (0) target = $region5
  $region4: #{tile.13} parent=0 // pred_region
    _
  $region5: #{tile.13} parent=0 // pred_fallthru
    _
  %v4 = vld [vmem:[%s0] ss:$0 sm:$0xff]
  %5 = vst [vmem:[%s1] sm:$0xff] %v4
  %s6 = scalar_lea.vmem %s1, 8
  %7 = vst [vmem:[%s6] sm:$0xff] %v4

// kernel: tile.14
$region0: #{tile.14}
  %s0 = inlined_call_operand.vmem [shape: f32[16,4], index: 0, kind: input, shape index: {}]
  %s1 = inlined_call_operand.vmem [shape: f32[1,64], index: 1, kind: output, shape index: {}]
  $region1: #{tile.14} parent=0
    #allocation0 [shape = 'u8[4096]{0}', space=vmem, size = 0x1000, scoped, tag = 'scoped mem for output reshape']
    %v2 = vld [vmem:[%s0] sm:$0x1]
    %vm3 = vcmask 31744
    %4 = vst.msk [vmem:[#allocation0] sm:$0x1] %vm3, %v2
    %s5 = scalar_lea.vmem %s0, 15
    %v6 = vld [vmem:[%s5] sm:$0x1]
    %7 = vrot.lane.b32.xlu0 %v6, 60
    %v8 = vpop.permute.xlu0 %7
    %vm9 = vcmask 523744
    %10 = vst.msk [vmem:[#allocation0] sm:$0x1] %vm9, %v8
    %s11 = scalar_lea.vmem %s0, 14
    %v12 = vld [vmem:[%s11] sm:$0x1]
    %13 = vrot.lane.b32.xlu0 %v12, 56
    %v14 = vpop.permute.xlu0 %13
    %vm15 = vcmask 490944
    %16 = vst.msk [vmem:[#allocation0] sm:$0x1] %vm15, %v14
    %s17 = scalar_lea.vmem %s0, 13
    %v18 = vld [vmem:[%s17] sm:$0x1]
    %19 = vrot.lane.b32.xlu0 %v18, 52
    %v20 = vpop.permute.xlu0 %19
    %vm21 = vcmask 458144
    %22 = vst.msk [vmem:[#allocation0] sm:$0x1] %vm21, %v20
    %s23 = scalar_lea.vmem %s0, 12
    %v24 = vld [vmem:[%s23] sm:$0x1]
    %25 = vrot.lane.b32.xlu0 %v24, 48
    %v26 = vpop.permute.xlu0 %25
    %vm27 = vcmask 425344
    %28 = vst.msk [vmem:[#allocation0] sm:$0x1] %vm27, %v26
    %s29 = scalar_lea.vmem %s0, 11
    %v30 = vld [vmem:[%s29] sm:$0x1]
    %31 = vrot.lane.b32.xlu0 %v30, 44
    %v32 = vpop.permute.xlu0 %31
    %vm33 = vcmask 392544
    %34 = vst.msk [vmem:[#allocation0] sm:$0x1] %vm33, %v32
    %s35 = scalar_lea.vmem %s0, 10
    %v36 = vld [vmem:[%s35] sm:$0x1]
    %37 = vrot.lane.b32.xlu0 %v36, 40
    %v38 = vpop.permute.xlu0 %37
    %vm39 = vcmask 359744
    %40 = vst.msk [vmem:[#allocation0] sm:$0x1] %vm39, %v38
    %s41 = scalar_lea.vmem %s0, 9
    %v42 = vld [vmem:[%s41] sm:$0x1]
    %43 = vrot.lane.b32.xlu0 %v42, 36
    %v44 = vpop.permute.xlu0 %43
    %vm45 = vcmask 326944
    %46 = vst.msk [vmem:[#allocation0] sm:$0x1] %vm45, %v44
    %s47 = scalar_lea.vmem %s0, 8
    %v48 = vld [vmem:[%s47] sm:$0x1]
    %49 = vrot.lane.b32.xlu0 %v48, 32
    %v50 = vpop.permute.xlu0 %49
    %vm51 = vcmask 294144
    %52 = vst.msk [vmem:[#allocation0] sm:$0x1] %vm51, %v50
    %s53 = scalar_lea.vmem %s0, 7
    %v54 = vld [vmem:[%s53] sm:$0x1]
    %55 = vrot.lane.b32.xlu0 %v54, 28
    %v56 = vpop.permute.xlu0 %55
    %vm57 = vcmask 261344
    %58 = vst.msk [vmem:[#allocation0] sm:$0x1] %vm57, %v56
    %s59 = scalar_lea.vmem %s0, 6
    %v60 = vld [vmem:[%s59] sm:$0x1]
    %61 = vrot.lane.b32.xlu0 %v60, 24
    %v62 = vpop.permute.xlu0 %61
    %vm63 = vcmask 228544
    %64 = vst.msk [vmem:[#allocation0] sm:$0x1] %vm63, %v62
    %s65 = scalar_lea.vmem %s0, 5
    %v66 = vld [vmem:[%s65] sm:$0x1]
    %67 = vrot.lane.b32.xlu0 %v66, 20
    %v68 = vpop.permute.xlu0 %67
    %vm69 = vcmask 195744
    %70 = vst.msk [vmem:[#allocation0] sm:$0x1] %vm69, %v68
    %s71 = scalar_lea.vmem %s0, 4
    %v72 = vld [vmem:[%s71] sm:$0x1]
    %73 = vrot.lane.b32.xlu0 %v72, 16
    %v74 = vpop.permute.xlu0 %73
    %vm75 = vcmask 162944
    %76 = vst.msk [vmem:[#allocation0] sm:$0x1] %vm75, %v74
    %s77 = scalar_lea.vmem %s0, 3
    %v78 = vld [vmem:[%s77] sm:$0x1]
    %79 = vrot.lane.b32.xlu0 %v78, 12
    %v80 = vpop.permute.xlu0 %79
    %vm81 = vcmask 130144
    %82 = vst.msk [vmem:[#allocation0] sm:$0x1] %vm81, %v80
    %s83 = scalar_lea.vmem %s0, 2
    %v84 = vld [vmem:[%s83] sm:$0x1]
    %85 = vrot.lane.b32.xlu0 %v84, 8
    %v86 = vpop.permute.xlu0 %85
    %vm87 = vcmask 97344
    %88 = vst.msk [vmem:[#allocation0] sm:$0x1] %vm87, %v86
    %s89 = scalar_lea.vmem %s0, 1
    %v90 = vld [vmem:[%s89] sm:$0x1]
    %91 = vrot.lane.b32.xlu0 %v90, 4
    %v92 = vpop.permute.xlu0 %91
    %vm93 = vcmask 64544
    %94 = vst.msk [vmem:[#allocation0] sm:$0x1] %vm93, %v92
    %s96 = ssub.s32 2, 1
    %v97 = vld [vmem:[#allocation0] sm:%s96]
    %s99 = ssub.s32 2, 1
    %100 = vst [vmem:[%s1] sm:%s99] %v97

// kernel: freq_attention_block.1
$region0: #{freq_attention_block.1}
  #allocation0 [shape = 'u32[]', space=smem, size = 0x4, offset = 0x4, fixed_abs, tag = 'smem constant byte address 0x4 - core index']
  #allocation1 [shape = 'u32[72,128]{1,0:T(1,128)}', space=vmem, size = 0x9000, scoped, tag = 'internal scratch']
  #allocation2 [shape = 'f32[18,64]{1,0:T(8,128)}', space=vmem, size = 0x3000, scoped, tag = 'scratch operand']
  #allocation3 [shape = 'f32[1,1]{1,0:T(1,128)S(6)}', space=smem, size = 0x200, scoped, tag = 'scoped memory for freq_attention_block.1']
  %s0 = inlined_call_operand.vmem [shape: f32[2,16,64], index: 0, kind: input, shape index: {}]
  %s1 = inlined_call_operand.vmem [shape: f32[64,64], index: 1, kind: input, shape index: {}]
  %s2 = inlined_call_operand.<no memory space> [shape: f32[1,1], index: 2, kind: input, shape index: {}]
  %s3 = inlined_call_operand.vmem [shape: f32[1,64], index: 3, kind: input, shape index: {}]
  %s4 = inlined_call_operand.vmem [shape: f32[1,64], index: 4, kind: input, shape index: {}]
  %s5 = inlined_call_operand.vmem [shape: bf16[3,64,128], index: 5, kind: input, shape index: {}]
  %s6 = inlined_call_operand.vmem [shape: f32[2,16,128], index: 6, kind: output, shape index: {}]
  %s7 = sld [smem:[#allocation0]]
  $region57: #{freq_attention_block.1} parent=0
    _
  %s9 = ssub.s32 1, %s7
  %s10 = scalar_select 0, %s9, %s7
  %11 = sst [smem:[#allocation3]] %s2
  loop: start=0, step=1, limit=4
  $region2: #{freq_attention_block.1} parent=0 // loop_pre_header
    _
  $region3: #{freq_attention_block.1} parent=0 // loop_header
    %s13 = sphi 0, %s17
    %p14 = scmp.ge.s32.totalorder %s13, 4
    %s23 = sphi 0, %s25
    %s26 = sphi 0, %s23
    %s27 = sphi 0, %s26
    %s43 = sphi 0, %s27
    %s47 = sphi 0, %s47
    %s49 = sphi 0, %s47
    %s50 = sphi 0, %s49
    %s64 = sphi 0, %s50
    %s68 = sphi 0, %s68
    %s70 = sphi 0, %s68
    %s71 = sphi 0, %s70
    %s85 = sphi 0, %s71
    %s89 = sphi 0, %s89
    %s91 = sphi 0, %s89
    %s92 = sphi 0, %s91
    %s106 = sphi 0, %s92
    %s110 = sphi 0, %s110
    %s112 = sphi 0, %s110
    %s113 = sphi 0, %s112
    %s127 = sphi 0, %s113
    %s131 = sphi 0, %s131
    %s133 = sphi 0, %s131
    %s134 = sphi 0, %s133
    %s148 = sphi 0, %s134
    %s154 = sphi 0, %s156
    %s157 = sphi 0, %s154
    %s158 = sphi 0, %s157
    %s174 = sphi 0, %s158
  $region4: #{freq_attention_block.1} parent=0 // loop_header_branch
    %16 = sbr.rel (%p14) target = $region8
  $region5: #{freq_attention_block.1} parent=0 // loop_body
    %s18 = ssub.s32 %s13, 1
    %s19 = ssub.s32 %s13, 2
    %s20 = sadd.s32 %s13, 1
    %s21 = ssub.s32 %s13, %s20
    %p22 = scmp.eq.s32.totalorder %s21, 0
    %s24 = sadd.s32 %s23, 1
    %s25 = scalar_select %p22, %s23, %s24
    %p28 = pneg %p22
    %p29 = scmp.eq.s32.totalorder %s13, 1
    %p30 = por %p28, %p29
    %p31 = scmp.ne.s32.totalorder %s23, %s26
    %p32 = scmp.eq.s32.totalorder %s13, 0
    %p33 = por %p31, %p32
    %p34 = scmp.ne.s32.totalorder %s23, %s26
    %p35 = scmp.eq.s32.totalorder %s18, 1
    %p36 = por %p34, %p35
    %p37 = scmp.ne.s32.totalorder %s26, %s27
    %p38 = scmp.eq.s32.totalorder %s18, 0
    %p39 = por %p37, %p38
    %p40 = scmp.ne.s32.totalorder %s26, %s27
    %p41 = scmp.eq.s32.totalorder %s19, 1
    %p42 = por %p40, %p41
    %p44 = scmp.ne.s32.totalorder %s27, %s43
    %p45 = scmp.eq.s32.totalorder %s19, 0
    %p46 = por %p44, %p45
    %s48 = sadd.s32 %s47, 1
    %p51 = scmp.eq.s32.totalorder %s13, 1
    %p52 = scmp.ne.s32.totalorder %s47, %s49
    %p53 = scmp.eq.s32.totalorder %s13, 0
    %p54 = por %p52, %p53
    %p55 = scmp.ne.s32.totalorder %s47, %s49
    %p56 = scmp.eq.s32.totalorder %s18, 1
    %p57 = por %p55, %p56
    %p58 = scmp.ne.s32.totalorder %s49, %s50
    %p59 = scmp.eq.s32.totalorder %s18, 0
    %p60 = por %p58, %p59
    %p61 = scmp.ne.s32.totalorder %s49, %s50
    %p62 = scmp.eq.s32.totalorder %s19, 1
    %p63 = por %p61, %p62
    %p65 = scmp.ne.s32.totalorder %s50, %s64
    %p66 = scmp.eq.s32.totalorder %s19, 0
    %p67 = por %p65, %p66
    %s69 = sadd.s32 %s68, 1
    %p72 = scmp.eq.s32.totalorder %s13, 1
    %p73 = scmp.ne.s32.totalorder %s68, %s70
    %p74 = scmp.eq.s32.totalorder %s13, 0
    %p75 = por %p73, %p74
    %p76 = scmp.ne.s32.totalorder %s68, %s70
    %p77 = scmp.eq.s32.totalorder %s18, 1
    %p78 = por %p76, %p77
    %p79 = scmp.ne.s32.totalorder %s70, %s71
    %p80 = scmp.eq.s32.totalorder %s18, 0
    %p81 = por %p79, %p80
    %p82 = scmp.ne.s32.totalorder %s70, %s71
    %p83 = scmp.eq.s32.totalorder %s19, 1
    %p84 = por %p82, %p83
    %p86 = scmp.ne.s32.totalorder %s71, %s85
    %p87 = scmp.eq.s32.totalorder %s19, 0
    %p88 = por %p86, %p87
    %s90 = sadd.s32 %s89, 1
    %p93 = scmp.eq.s32.totalorder %s13, 1
    %p94 = scmp.ne.s32.totalorder %s89, %s91
    %p95 = scmp.eq.s32.totalorder %s13, 0
    %p96 = por %p94, %p95
    %p97 = scmp.ne.s32.totalorder %s89, %s91
    %p98 = scmp.eq.s32.totalorder %s18, 1
    %p99 = por %p97, %p98
    %p100 = scmp.ne.s32.totalorder %s91, %s92
    %p101 = scmp.eq.s32.totalorder %s18, 0
    %p102 = por %p100, %p101
    %p103 = scmp.ne.s32.totalorder %s91, %s92
    %p104 = scmp.eq.s32.totalorder %s19, 1
    %p105 = por %p103, %p104
    %p107 = scmp.ne.s32.totalorder %s92, %s106
    %p108 = scmp.eq.s32.totalorder %s19, 0
    %p109 = por %p107, %p108
    %s111 = sadd.s32 %s110, 1
    %p114 = scmp.eq.s32.totalorder %s13, 1
    %p115 = scmp.ne.s32.totalorder %s110, %s112
    %p116 = scmp.eq.s32.totalorder %s13, 0
    %p117 = por %p115, %p116
    %p118 = scmp.ne.s32.totalorder %s110, %s112
    %p119 = scmp.eq.s32.totalorder %s18, 1
    %p120 = por %p118, %p119
    %p121 = scmp.ne.s32.totalorder %s112, %s113
    %p122 = scmp.eq.s32.totalorder %s18, 0
    %p123 = por %p121, %p122
    %p124 = scmp.ne.s32.totalorder %s112, %s113
    %p125 = scmp.eq.s32.totalorder %s19, 1
    %p126 = por %p124, %p125
    %p128 = scmp.ne.s32.totalorder %s113, %s127
    %p129 = scmp.eq.s32.totalorder %s19, 0
    %p130 = por %p128, %p129
    %s132 = sadd.s32 %s131, 1
    %p135 = scmp.eq.s32.totalorder %s13, 1
    %p136 = scmp.ne.s32.totalorder %s131, %s133
    %p137 = scmp.eq.s32.totalorder %s13, 0
    %p138 = por %p136, %p137
    %p139 = scmp.ne.s32.totalorder %s131, %s133
    %p140 = scmp.eq.s32.totalorder %s18, 1
    %p141 = por %p139, %p140
    %p142 = scmp.ne.s32.totalorder %s133, %s134
    %p143 = scmp.eq.s32.totalorder %s18, 0
    %p144 = por %p142, %p143
    %p145 = scmp.ne.s32.totalorder %s133, %s134
    %p146 = scmp.eq.s32.totalorder %s19, 1
    %p147 = por %p145, %p146
    %p149 = scmp.ne.s32.totalorder %s134, %s148
    %p150 = scmp.eq.s32.totalorder %s19, 0
    %p151 = por %p149, %p150
    %s152 = ssub.s32 %s13, %s20
    %p153 = scmp.eq.s32.totalorder %s152, 0
    %s155 = sadd.s32 %s154, 1
    %s156 = scalar_select %p153, %s154, %s155
    %p159 = pneg %p153
    %p160 = scmp.eq.s32.totalorder %s13, 1
    %p161 = por %p159, %p160
    %p162 = scmp.ne.s32.totalorder %s154, %s157
    %p163 = scmp.eq.s32.totalorder %s13, 0
    %p164 = por %p162, %p163
    %p165 = scmp.ne.s32.totalorder %s154, %s157
    %p166 = scmp.eq.s32.totalorder %s18, 1
    %p167 = por %p165, %p166
    %p168 = scmp.ne.s32.totalorder %s157, %s158
    %p169 = scmp.eq.s32.totalorder %s18, 0
    %p170 = por %p168, %p169
    %p171 = scmp.ne.s32.totalorder %s157, %s158
    %p172 = scmp.eq.s32.totalorder %s19, 1
    %p173 = por %p171, %p172
    %p175 = scmp.ne.s32.totalorder %s158, %s174
    %p176 = scmp.eq.s32.totalorder %s19, 0
    %p177 = por %p175, %p176
    %p178 = scmp.le.s32.totalorder 1, %s13
    %p179 = scmp.lt.s32.totalorder %s13, 3
    %p180 = pnand %p178, %p179
    %p181 = pneg %p180
    // Predicated region
    $region9: #{freq_attention_block.1} parent=5 // pred_check
      _
    $region10: #{freq_attention_block.1} parent=5 // pred_check_branch
      %183 = sbr.rel (%p180) target = $region12
    $region11: #{freq_attention_block.1} parent=5 // pred_region
      %s184 = ssub.s32 %s13, 1
      // Predicated region
      $region13: #{freq_attention_block.1} parent=11 // pred_check
        %p185 = pneg %p60
      $region14: #{freq_attention_block.1} parent=11 // pred_check_branch
        %187 = sbr.rel (%p185) target = $region16
      $region15: #{freq_attention_block.1} parent=11 // pred_region
        _
      $region16: #{freq_attention_block.1} parent=11 // pred_fallthru
        _
      // Predicated region
      $region17: #{freq_attention_block.1} parent=11 // pred_check
        %p188 = pneg %p81
      $region18: #{freq_attention_block.1} parent=11 // pred_check_branch
        %190 = sbr.rel (%p188) target = $region20
      $region19: #{freq_attention_block.1} parent=11 // pred_region
        _
      $region20: #{freq_attention_block.1} parent=11 // pred_fallthru
        _
      // Predicated region
      $region21: #{freq_attention_block.1} parent=11 // pred_check
        %p191 = pneg %p102
      $region22: #{freq_attention_block.1} parent=11 // pred_check_branch
        %193 = sbr.rel (%p191) target = $region24
      $region23: #{freq_attention_block.1} parent=11 // pred_region
        _
      $region24: #{freq_attention_block.1} parent=11 // pred_fallthru
        _
      // Predicated region
      $region25: #{freq_attention_block.1} parent=11 // pred_check
        %p194 = pneg %p123
      $region26: #{freq_attention_block.1} parent=11 // pred_check_branch
        %196 = sbr.rel (%p194) target = $region28
      $region27: #{freq_attention_block.1} parent=11 // pred_region
        _
      $region28: #{freq_attention_block.1} parent=11 // pred_fallthru
        _
      // Predicated region
      $region29: #{freq_attention_block.1} parent=11 // pred_check
        %p197 = pneg %p144
      $region30: #{freq_attention_block.1} parent=11 // pred_check_branch
        %199 = sbr.rel (%p197) target = $region32
      $region31: #{freq_attention_block.1} parent=11 // pred_region
        _
      $region32: #{freq_attention_block.1} parent=11 // pred_fallthru
        _
    $region12: #{freq_attention_block.1} parent=5 // pred_fallthru
      _
    %p200 = scmp.lt.s32.totalorder %s13, 2
    // Predicated region
    $region33: #{freq_attention_block.1} parent=5 // pred_check
      %p201 = pneg %p200
    $region34: #{freq_attention_block.1} parent=5 // pred_check_branch
      %203 = sbr.rel (%p201) target = $region36
    $region35: #{freq_attention_block.1} parent=5 // pred_region
      // Predicated region
      $region37: #{freq_attention_block.1} parent=35 // pred_check
        %p204 = pneg %p33
      $region38: #{freq_attention_block.1} parent=35 // pred_check_branch
        %206 = sbr.rel (%p204) target = $region40
      $region39: #{freq_attention_block.1} parent=35 // pred_region
        %p207 = scmp.lt.s32.totalorder %s13, 1
        %s208 = scalar_select %p207, %s13, 1
        %s209 = smul.addr %s208, 2
        %s210 = smul.addr %s209, 8
        %s211 = scalar_lea.vmem %s0, %s210
      $region40: #{freq_attention_block.1} parent=35 // pred_fallthru
        _
    $region36: #{freq_attention_block.1} parent=5 // pred_fallthru
      _
    %p212 = scmp.le.s32.totalorder 1, %s13
    %p213 = scmp.lt.s32.totalorder %s13, 3
    %p214 = pnand %p212, %p213
    %p215 = pneg %p214
    // Predicated region
    $region41: #{freq_attention_block.1} parent=5 // pred_check
      _
    $region42: #{freq_attention_block.1} parent=5 // pred_check_branch
      %217 = sbr.rel (%p214) target = $region44
    $region43: #{freq_attention_block.1} parent=5 // pred_region
      %s218 = ssub.s32 %s13, 1
      %p219 = scmp.lt.s32.totalorder %s18, 1
      %s220 = scalar_select %p219, %s18, 1
      %s221 = smul.addr %s220, 2
      %s222 = smul.addr %s221, 8
      %s223 = scalar_lea.vmem %s0, %s222
      %p224 = pneg %p39
      %p225 = pneg %p36
      %p226 = pneg %p60
      %p227 = pneg %p57
      %p228 = pneg %p81
      %p229 = pneg %p78
      %p230 = pneg %p102
      %p231 = pneg %p99
      %p232 = pneg %p123
      %p233 = pneg %p120
      %p234 = pneg %p144
      %p235 = pneg %p141
      %p236 = pneg %p170
      %p237 = pneg %p167
      %p238 = scmp.lt.s32.totalorder %s18, 1
      %s239 = scalar_select %p238, %s18, 1
      %s240 = smul.addr %s239, 2
      %s241 = smul.addr %s240, 8
      %s242 = scalar_lea.vmem %s6, %s241
      %p243 = scmp.lt.s32.totalorder %s18, 1
      %s244 = scalar_select %p243, %s18, 1
      %s245 = smul.addr %s244, 2
      %s246 = smul.addr %s245, 8
      %s247 = scalar_lea.vmem %s0, %s246
      %p248 = scmp.lt.s32.totalorder %s18, 1
      %s249 = scalar_select %p248, %s18, 1
      %s250 = smul.addr %s249, 2
      %s251 = smul.addr %s250, 8
      %s252 = scalar_lea.vmem %s6, %s251
      %v254 = vld [vmem:[%s247] sm:$0xff]
      %v255 = vld [vmem:[%s247 + $0x8] sm:$0xff]
      %v256 = vld [vmem:[%s1] sm:$0xff]
      %v257 = vld [vmem:[%s1 + $0x8] sm:$0xff]
      %v258 = vld [vmem:[%s1 + $0x10] sm:$0xff]
      %v259 = vld [vmem:[%s1 + $0x18] sm:$0xff]
      %v260 = vld [vmem:[%s1 + $0x20] sm:$0xff]
      %v261 = vld [vmem:[%s1 + $0x28] sm:$0xff]
      %v262 = vld [vmem:[%s1 + $0x30] sm:$0xff]
      %v263 = vld [vmem:[%s1 + $0x38] sm:$0xff]
      %s264 = sld [smem:[#allocation3]]
      %v265 = vstv %s264
      %vm266 = vcmask 523264
      %v268 = vsel %vm266, %v254, 0
      %v271 = vsel %vm266, %v255, 0
      %273 = vmatpush.msra.mxu0 0.0
      %274 = vmatpush.msra.mxu0 0.0
      %275 = vmatpush.msra.mxu0 0.0
      %276 = vmatpush.msra.mxu0 0.0
      %277 = vmatpush.msra.mxu0 0.0
      %278 = vmatpush.msra.mxu0 0.0
      %279 = vmatpush.msra.mxu0 0.0
      %280 = vmatpush.msra.mxu0 0.0
      %281 = vmatpush.msra.mxu0 %v263
      %282 = vmatpush.msra.mxu0 %v262
      %283 = vmatpush.msra.mxu0 %v261
      %284 = vmatpush.msra.mxu0 %v260
      %285 = vmatpush.msra.mxu0 %v259
      %286 = vmatpush.msra.mxu0 %v258
      %287 = vmatpush.msra.mxu0 %v257
      %288 = vmatpush.msra.mxu0 %v256
      %289 = vmatmul.f32.gmra.mxu0 %v268
      %v290 = vpop.f32.mrf.mxu0
      %v291 = vadd.f32 %v265, %v290
      %292 = vmatmul.f32.gmra.mxu0 %v271
      %v293 = vpop.f32.mrf.mxu0
      %v294 = vadd.f32 %v265, %v293
      %295 = vdwg.mxu0
      %v296 = vxor.u32 %v291, 2147483648
      %v297 = vxor.u32 %v294, 2147483648
      %v298 = vmul.f32 %v296, 1.442695
      %v299 = vpow.pop %v298
      %v300 = vmul.f32 %v297, 1.442695
      %v301 = vpow.pop %v300
      %v302 = vadd.f32 %v299, 1.0
      %v303 = vadd.f32 %v301, 1.0
      %v304 = vrcp.pop %v302
      %v305 = vmul.f32 %v302, %v304
      %v306 = vsub.f32 1.0, %v305
      %v307 = vmul.f32 %v304, %v306
      %v308 = vadd.f32 %v304, %v307
      %vm309 = vweird.f32 %v302
      %vm310 = vweird.f32 %v304
      %vm311 = vmor %vm309, %vm310
      %v312 = vsel %vm311, %v304, %v308
      %v313 = vand.u32 2147483647, %v302
      %vm314 = vcmp.eq.f32.partialorder %v313, 8.507059e+37
      %v315 = vand.u32 %v302, 2147483648
      %v316 = vor.u32 1.1754944e-38, %v315
      %v317 = vsel %vm314, %v316, %v312
      %v318 = vmul.f32 1.0, %v317
      %v319 = vrcp.pop %v303
      %v320 = vmul.f32 %v303, %v319
      %v321 = vsub.f32 1.0, %v320
      %v322 = vmul.f32 %v319, %v321
      %v323 = vadd.f32 %v319, %v322
      %vm324 = vweird.f32 %v303
      %vm325 = vweird.f32 %v319
      %vm326 = vmor %vm324, %vm325
      %v327 = vsel %vm326, %v319, %v323
      %v328 = vand.u32 2147483647, %v303
      %vm329 = vcmp.eq.f32.partialorder %v328, 8.507059e+37
      %v330 = vand.u32 %v303, 2147483648
      %v331 = vor.u32 1.1754944e-38, %v330
      %v332 = vsel %vm329, %v331, %v327
      %v333 = vmul.f32 1.0, %v332
      %v334 = vmul.f32 %v318, %v254
      %v335 = vmul.f32 %v333, %v255
      %v336 = vld [vmem:[%s3] sm:$0x1]
      %v338 = vperm.slane %v336, 0
      %v340 = vmul.f32 %v334, %v338
      %v341 = vmul.f32 %v335, %v338
      %v342 = vld [vmem:[%s4] sm:$0x1]
      %v344 = vperm.slane %v342, 0
      %v346 = vadd.f32 %v340, %v344
      %v347 = vadd.f32 %v341, %v344
      %vm348 = vcmask 516096
      %349 = vst.msk [vmem:[#allocation2] sm:$0x1] %vm348, 0.0
      %350 = vst.msk [vmem:[#allocation2 + $0x11] sm:$0x1] %vm348, 0.0
      %351 = vst.msk [vmem:[#allocation2 + $0x1] sm:$0xff] %vm266, %v346
      %352 = vst.msk [vmem:[#allocation2 + $0x9] sm:$0xff] %vm266, %v347
      %v353 = vld [vmem:[#allocation2] sm:$0xff]
      %v354 = vld [vmem:[#allocation2 + $0x8] sm:$0xff]
      %v355 = vpack.c.bf16 %v354, %v353
      %v356 = vld [vmem:[%s5] sm:$0xf]
      %v357 = vld [vmem:[%s5 + $0x4] sm:$0xf]
      %v358 = vld [vmem:[%s5 + $0x8] sm:$0xf]
      %v359 = vld [vmem:[%s5 + $0xc] sm:$0xf]
      %v360 = vld [vmem:[%s5 + $0x10] sm:$0xf]
      %v361 = vld [vmem:[%s5 + $0x14] sm:$0xf]
      %v362 = vld [vmem:[%s5 + $0x18] sm:$0xf]
      %v363 = vld [vmem:[%s5 + $0x1c] sm:$0xf]
      %v364 = vld [vmem:[#allocation2 + $0x1] sm:$0xff]
      %v365 = vld [vmem:[#allocation2 + $0x9] sm:$0xff]
      %v366 = vpack.c.bf16 %v365, %v364
      %s367 = scalar_lea.vmem %s5, 32
      %v368 = vld [vmem:[%s367] sm:$0xf]
      %v369 = vld [vmem:[%s367 + $0x4] sm:$0xf]
      %v370 = vld [vmem:[%s367 + $0x8] sm:$0xf]
      %v371 = vld [vmem:[%s367 + $0xc] sm:$0xf]
      %v372 = vld [vmem:[%s367 + $0x10] sm:$0xf]
      %v373 = vld [vmem:[%s367 + $0x14] sm:$0xf]
      %v374 = vld [vmem:[%s367 + $0x18] sm:$0xf]
      %v375 = vld [vmem:[%s367 + $0x1c] sm:$0xf]
      %v384 = vunpack.c.l.b16 %v368
      %v385 = vunpack.c.l.b16 %v369
      %v386 = vunpack.c.l.b16 %v370
      %v387 = vunpack.c.l.b16 %v371
      %v388 = vunpack.c.l.b16 %v372
      %v389 = vunpack.c.l.b16 %v373
      %v390 = vunpack.c.l.b16 %v374
      %v391 = vunpack.c.l.b16 %v375
      %v392 = vpack.c.b16 %v385, %v384
      %v393 = vpack.c.b16 %v387, %v386
      %v394 = vpack.c.b16 %v389, %v388
      %v395 = vpack.c.b16 %v391, %v390
      %v401 = vsel %vm266, %v366, 0
      %403 = vmatpush.bf16.msra.mxu0 0
      %404 = vmatpush.bf16.msra.mxu0 0
      %405 = vmatpush.bf16.msra.mxu0 0
      %406 = vmatpush.bf16.msra.mxu0 0
      %407 = vmatpush.bf16.msra.mxu0 %v395
      %408 = vmatpush.bf16.msra.mxu0 %v394
      %409 = vmatpush.bf16.msra.mxu0 %v393
      %410 = vmatpush.bf16.msra.mxu0 %v392
      %411 = vmatmul.bf16.gmra.mxu0 %v401
      %v412 = vpop.f32.mrf.mxu0
      %v413 = vadd.f32 0.0, %v412
      %v414 = vpop.f32.mrf.mxu0
      %v415 = vadd.f32 0.0, %v414
      %416 = vdwg.mxu0
      %v425 = vunpack.c.l.b16 %v356
      %v426 = vunpack.c.l.b16 %v357
      %v427 = vunpack.c.l.b16 %v358
      %v428 = vunpack.c.l.b16 %v359
      %v429 = vunpack.c.l.b16 %v360
      %v430 = vunpack.c.l.b16 %v361
      %v431 = vunpack.c.l.b16 %v362
      %v432 = vunpack.c.l.b16 %v363
      %v433 = vpack.c.b16 %v426, %v425
      %v434 = vpack.c.b16 %v428, %v427
      %v435 = vpack.c.b16 %v430, %v429
      %v436 = vpack.c.b16 %v432, %v431
      %v442 = vsel %vm266, %v355, 0
      %444 = vmatpush.bf16.msra.mxu0 0
      %445 = vmatpush.bf16.msra.mxu0 0
      %446 = vmatpush.bf16.msra.mxu0 0
      %447 = vmatpush.bf16.msra.mxu0 0
      %448 = vmatpush.bf16.msra.mxu0 %v436
      %449 = vmatpush.bf16.msra.mxu0 %v435
      %450 = vmatpush.bf16.msra.mxu0 %v434
      %451 = vmatpush.bf16.msra.mxu0 %v433
      %452 = vmatmul.bf16.gmra.mxu0 %v442
      %v453 = vpop.f32.mrf.mxu0
      %v454 = vadd.f32 %v413, %v453
      %v455 = vpop.f32.mrf.mxu0
      %v456 = vadd.f32 %v415, %v455
      %457 = vdwg.mxu0
      %v458 = vld [vmem:[#allocation2 + $0x2] sm:$0xff]
      %v459 = vld [vmem:[#allocation2 + $0xa] sm:$0xff]
      %v460 = vpack.c.bf16 %v459, %v458
      %s461 = scalar_lea.vmem %s5, 64
      %v462 = vld [vmem:[%s461] sm:$0xf]
      %v463 = vld [vmem:[%s461 + $0x4] sm:$0xf]
      %v464 = vld [vmem:[%s461 + $0x8] sm:$0xf]
      %v465 = vld [vmem:[%s461 + $0xc] sm:$0xf]
      %v466 = vld [vmem:[%s461 + $0x10] sm:$0xf]
      %v467 = vld [vmem:[%s461 + $0x14] sm:$0xf]
      %v468 = vld [vmem:[%s461 + $0x18] sm:$0xf]
      %v469 = vld [vmem:[%s461 + $0x1c] sm:$0xf]
      %v478 = vunpack.c.l.b16 %v462
      %v479 = vunpack.c.l.b16 %v463
      %v480 = vunpack.c.l.b16 %v464
      %v481 = vunpack.c.l.b16 %v465
      %v482 = vunpack.c.l.b16 %v466
      %v483 = vunpack.c.l.b16 %v467
      %v484 = vunpack.c.l.b16 %v468
      %v485 = vunpack.c.l.b16 %v469
      %v486 = vpack.c.b16 %v479, %v478
      %v487 = vpack.c.b16 %v481, %v480
      %v488 = vpack.c.b16 %v483, %v482
      %v489 = vpack.c.b16 %v485, %v484
      %v495 = vsel %vm266, %v460, 0
      %497 = vmatpush.bf16.msra.mxu0 0
      %498 = vmatpush.bf16.msra.mxu0 0
      %499 = vmatpush.bf16.msra.mxu0 0
      %500 = vmatpush.bf16.msra.mxu0 0
      %501 = vmatpush.bf16.msra.mxu0 %v489
      %502 = vmatpush.bf16.msra.mxu0 %v488
      %503 = vmatpush.bf16.msra.mxu0 %v487
      %504 = vmatpush.bf16.msra.mxu0 %v486
      %505 = vmatmul.bf16.gmra.mxu0 %v495
      %v506 = vpop.f32.mrf.mxu0
      %v507 = vadd.f32 0.0, %v506
      %v508 = vpop.f32.mrf.mxu0
      %v509 = vadd.f32 0.0, %v508
      %510 = vdwg.mxu0
      %v511 = vadd.f32 %v454, %v507
      %v512 = vadd.f32 %v456, %v509
      %v513 = vmax.f32 %v511, 0.0
      %v514 = vmax.f32 %v512, 0.0
      %515 = vst [vmem:[%s252] sm:$0xff] %v513
      %516 = vst [vmem:[%s252 + $0x8] sm:$0xff] %v514
      %p517 = scmp.lt.s32.totalorder %s18, 1
      %s518 = scalar_select %p517, %s18, 1
      %s519 = smul.addr %s518, 2
      %s520 = smul.addr %s519, 8
      %s521 = scalar_lea.vmem %s6, %s520
      // Predicated region
      $region45: #{freq_attention_block.1} parent=43 // pred_check
        %p522 = pneg %p167
      $region46: #{freq_attention_block.1} parent=43 // pred_check_branch
        %524 = sbr.rel (%p522) target = $region48
      $region47: #{freq_attention_block.1} parent=43 // pred_region
        _
      $region48: #{freq_attention_block.1} parent=43 // pred_fallthru
        _
    $region44: #{freq_attention_block.1} parent=5 // pred_fallthru
      _
    %p525 = scmp.le.s32.totalorder 2, %s13
    // Predicated region
    $region49: #{freq_attention_block.1} parent=5 // pred_check
      %p526 = pneg %p525
    $region50: #{freq_attention_block.1} parent=5 // pred_check_branch
      %528 = sbr.rel (%p526) target = $region52
    $region51: #{freq_attention_block.1} parent=5 // pred_region
      %s529 = ssub.s32 %s13, 2
      // Predicated region
      $region53: #{freq_attention_block.1} parent=51 // pred_check
        %p530 = pneg %p173
      $region54: #{freq_attention_block.1} parent=51 // pred_check_branch
        %532 = sbr.rel (%p530) target = $region56
      $region55: #{freq_attention_block.1} parent=51 // pred_region
        %p533 = scmp.lt.s32.totalorder %s19, 1
        %s534 = scalar_select %p533, %s19, 1
        %s535 = smul.addr %s534, 2
        %s536 = smul.addr %s535, 8
        %s537 = scalar_lea.vmem %s6, %s536
      $region56: #{freq_attention_block.1} parent=51 // pred_fallthru
        _
    $region52: #{freq_attention_block.1} parent=5 // pred_fallthru
      _
  $region6: #{freq_attention_block.1} parent=0 // loop_footer
    %s17 = sadd.s32 1, %s13
  $region7: #{freq_attention_block.1} parent=0 // loop_footer_branch
    %12 = sbr.rel target = $region3
  $region8: #{freq_attention_block.1} parent=0 // loop_exit
    _

</llo_original>
